<compile_context>
chip_gen: v5e
topology: v5e:2x2
jax: 0.10.0
libtpu: 0.0.40
codegen_flags: <defaults>
</compile_context>

<pallas_src>
import functools

import jax
import jax.numpy as jnp
from jax.experimental import pallas as pl
from jax.experimental.pallas import tpu as pltpu

LANE = 128


def _round_up(x: int, m: int) -> int:
    return ((x + m - 1) // m) * m


def _fused_mlp_kernel(*refs, n_layers: int):
    # refs = (xT_ref, w0, b0, w1, b1, ..., w_{L-1}, b_{L-1}, outT_ref)
    # Layout: features on sublanes, batch on lanes.
    #   xT_ref  : (K,     TN)
    #   w_l     : (out_l, in_l)   (PyTorch-native)
    #   b_l     : (out_l, 1)
    #   outT_ref: (n_out, TN)
    xT_ref = refs[0]
    outT_ref = refs[-1]

    acc = xT_ref[...].astype(jnp.float32)            # (K, TN)
    for l in range(n_layers):
        w = refs[1 + 2 * l][...].astype(jnp.float32)  # (out, in)
        b = refs[2 + 2 * l][...].astype(jnp.float32)  # (out, 1)
        k_in = w.shape[1]
        if k_in <= 4:
            # Tiny contraction (e.g. first layer, K=2): rank-1 VPU FMAs,
            # avoids the MXU pipeline latency entirely.
            new = b                                    # (out, 1) broadcast over lanes
            for j in range(k_in):
                new = new + w[:, j:j + 1] * acc[j:j + 1, :]
            acc = new                                  # (out, TN)
        else:
            # MXU matmul, f32 accumulation; bias epilogue on the VPU.
            acc = jnp.dot(w, acc,
                          preferred_element_type=jnp.float32,
                          precision=jax.lax.Precision.HIGHEST) + b
        if l < n_layers - 1:
            acc = jnp.maximum(acc, 0.0)

    outT_ref[...] = acc.astype(outT_ref.dtype)


def custom_net_forward(params, x, *, max_tile_lanes: int = 8192):
    """Fused forward pass: ReLU(Linear) for all but the last layer, plain Linear last.

    One pallas_call for the whole MLP. Batch lives on lanes; the whole (padded) batch
    is a single block when it fits `max_tile_lanes`, otherwise it is split into an
    even number of balanced lane-dense tiles (megacore friendly). Weights/biases use
    constant index_maps -> DMA'd to VMEM once, resident across every grid step.
    """
    M, K = x.shape
    n_layers = len(params)
    n_out = params[-1][0].shape[0]
    dtype = x.dtype

    # Batch tile (lane) sizing: one block if it fits, else an even number of tiles.
    M_lanes = _round_up(M, LANE)
    n_tiles = pl.cdiv(M_lanes, max_tile_lanes)
    if n_tiles > 1:
        n_tiles = _round_up(n_tiles, 2)            # balanced across v7x's 2 TCs
    TN = _round_up(pl.cdiv(M_lanes, n_tiles), LANE)
    M_pad = TN * n_tiles

    # Feature-major activations: (K, M_pad). Transpose + lane-pad is one tiny fused
    # XLA op on a (2, M) array (a few KB), not a full batch-major copy.
    xT = x.T
    if M_pad != M:
        xT = jnp.pad(xT, ((0, 0), (0, M_pad - M)))

    flat_inputs = [xT]
    in_specs = [pl.BlockSpec((K, TN), lambda i: (0, i))]
    flops = 0
    bytes_accessed = (K * M_pad + n_out * M_pad) * jnp.dtype(dtype).itemsize
    for (W, b) in params:
        n_o, n_i = W.shape
        b2 = b.reshape(n_o, 1)
        flat_inputs.append(W)
        flat_inputs.append(b2)
        # Full-array blocks (satisfy the (8,128) rule via "equal full dim"),
        # constant index_map -> VMEM-resident across all grid steps.
        in_specs.append(pl.BlockSpec((n_o, n_i), lambda i: (0, 0)))
        in_specs.append(pl.BlockSpec((n_o, 1), lambda i: (0, 0)))
        flops += 2 * M_pad * n_i * n_o
        bytes_accessed += W.size * W.dtype.itemsize + b2.size * b2.dtype.itemsize

    out_specs = pl.BlockSpec((n_out, TN), lambda i: (0, i))
    kernel = functools.partial(_fused_mlp_kernel, n_layers=n_layers)

    outT = pl.pallas_call(
        kernel,
        out_shape=jax.ShapeDtypeStruct((n_out, M_pad), dtype),
        grid=(n_tiles,),
        in_specs=in_specs,
        out_specs=out_specs,
        compiler_params=pltpu.CompilerParams(
            # batch tiles are independent -> shard across TensorCores on v7x;
            # on v5e/v6e the (usually length-1) grid is just a sequential loop.
            dimension_semantics=("parallel",),
        ),
        cost_estimate=pl.CostEstimate(
            flops=flops, transcendentals=0, bytes_accessed=bytes_accessed
        ),
    )(*flat_inputs)

    # Drop padded batch lanes, back to (batch, features).
    return outT[:, :M].T


def init_custom_net_params(key, layers):
    """Deterministic parameter init matching nn.Linear.

    Returns list of (W, b) with W: (out, in) (PyTorch-native), b: (out,),
    using the same 1/sqrt(fan_in) uniform bound.
    """
    params = []
    for i in range(len(layers) - 1):
        fan_in, fan_out = layers[i], layers[i + 1]
        key, kw, kb = jax.random.split(key, 3)
        bound = 1.0 / jnp.sqrt(jnp.float32(fan_in))
        W = jax.random.uniform(kw, (fan_out, fan_in), jnp.float32, -bound, bound)
        b = jax.random.uniform(kb, (fan_out,), jnp.float32, -bound, bound)
        params.append((W, b))
    return params


def custom_net_forward_ref(params, x):
    """Pure-JAX reference for verification (x @ W.T + b, ReLU except last)."""
    n = len(params)
    for i, (W, b) in enumerate(params):
        x = jnp.dot(x, W.T, precision=jax.lax.Precision.HIGHEST) + b
        if i < n - 1:
            x = jnp.maximum(x, 0.0)
    return x


if __name__ == "__main__":
    key = jax.random.PRNGKey(0)

    # Small PI-DeepONet-style trunk/branch net: [2, 32, 32, 16]
    layers = [2, 32, 32, 16]
    params = init_custom_net_params(key, layers)

    # Case 1: tiny batch (single lane-dense block, grid=(1,))
    batch = 8
    key, kx = jax.random.split(key)
    x = jax.random.normal(kx, (batch, layers[0]), jnp.float32)
    out = jax.block_until_ready(custom_net_forward(params, x))
    ref = custom_net_forward_ref(params, x)
    assert out.shape == (batch, layers[-1])
    assert jnp.allclose(out, ref, atol=1e-4, rtol=1e-4)

    # Case 2: larger, non-128-multiple batch -> still a single block (1152 lanes)
    batch2 = 1100
    key, kx2 = jax.random.split(key)
    x2 = jax.random.normal(kx2, (batch2, layers[0]), jnp.float32)
    out2 = jax.block_until_ready(custom_net_forward(params, x2))
    ref2 = custom_net_forward_ref(params, x2)
    assert out2.shape == (batch2, layers[-1])
    assert jnp.allclose(out2, ref2, atol=1e-4, rtol=1e-4)

    print("KERNEL_OK")
</pallas_src>

<mosaic_0001>
module attributes {stable_mosaic.version = 11 : i64} {
  func.func @_fused_mlp_kernel(%arg0: i32, %arg1: memref<2x128xf32, #tpu.memory_space<vmem>>, %arg2: memref<32x2xf32, #tpu.memory_space<vmem>>, %arg3: memref<32x1xf32, #tpu.memory_space<vmem>>, %arg4: memref<32x32xf32, #tpu.memory_space<vmem>>, %arg5: memref<32x1xf32, #tpu.memory_space<vmem>>, %arg6: memref<16x32xf32, #tpu.memory_space<vmem>>, %arg7: memref<16x1xf32, #tpu.memory_space<vmem>>, %arg8: memref<16x128xf32, #tpu.memory_space<vmem>>) attributes {dimension_semantics = [#tpu.dimension_semantics<parallel>], iteration_bounds = array<i64: 1>, scalar_prefetch = 0 : i64, scratch_operands = 0 : i64, tpu.core_type = #tpu.core_type<tc>, window_params = [{transform_indices = @transform_0, window_bounds = array<i64: 2, 128>}, {pipeline_mode = #tpu.pipeline_mode<synchronous>, transform_indices = @transform_1, window_bounds = array<i64: 32, 2>}, {pipeline_mode = #tpu.pipeline_mode<synchronous>, transform_indices = @transform_2, window_bounds = array<i64: 32, 1>}, {pipeline_mode = #tpu.pipeline_mode<synchronous>, transform_indices = @transform_3, window_bounds = array<i64: 32, 32>}, {pipeline_mode = #tpu.pipeline_mode<synchronous>, transform_indices = @transform_4, window_bounds = array<i64: 32, 1>}, {pipeline_mode = #tpu.pipeline_mode<synchronous>, transform_indices = @transform_5, window_bounds = array<i64: 16, 32>}, {pipeline_mode = #tpu.pipeline_mode<synchronous>, transform_indices = @transform_6, window_bounds = array<i64: 16, 1>}, {transform_indices = @transform_7, window_bounds = array<i64: 16, 128>}]} {
    %c0 = arith.constant 0 : index
    %c0_0 = arith.constant 0 : index
    %0 = vector.load %arg1[%c0, %c0_0] : memref<2x128xf32, #tpu.memory_space<vmem>>, vector<2x128xf32>
    %c0_1 = arith.constant 0 : index
    %c0_2 = arith.constant 0 : index
    %1 = vector.load %arg2[%c0_1, %c0_2] : memref<32x2xf32, #tpu.memory_space<vmem>>, vector<32x2xf32>
    %c0_3 = arith.constant 0 : index
    %c0_4 = arith.constant 0 : index
    %2 = vector.load %arg3[%c0_3, %c0_4] : memref<32x1xf32, #tpu.memory_space<vmem>>, vector<32x1xf32>
    %3 = vector.extract_strided_slice %1 {offsets = [0, 0], sizes = [32, 1], strides = [1, 1]} : vector<32x2xf32> to vector<32x1xf32>
    %4 = vector.extract_strided_slice %0 {offsets = [0, 0], sizes = [1, 128], strides = [1, 1]} : vector<2x128xf32> to vector<1x128xf32>
    %5 = vector.broadcast %3 : vector<32x1xf32> to vector<32x128xf32>
    %6 = vector.broadcast %4 : vector<1x128xf32> to vector<32x128xf32>
    %7 = arith.mulf %5, %6 : vector<32x128xf32>
    %8 = vector.broadcast %2 : vector<32x1xf32> to vector<32x128xf32>
    %9 = arith.addf %8, %7 : vector<32x128xf32>
    %10 = vector.extract_strided_slice %1 {offsets = [0, 1], sizes = [32, 1], strides = [1, 1]} : vector<32x2xf32> to vector<32x1xf32>
    %11 = vector.extract_strided_slice %0 {offsets = [1, 0], sizes = [1, 128], strides = [1, 1]} : vector<2x128xf32> to vector<1x128xf32>
    %12 = vector.broadcast %10 : vector<32x1xf32> to vector<32x128xf32>
    %13 = vector.broadcast %11 : vector<1x128xf32> to vector<32x128xf32>
    %14 = arith.mulf %12, %13 : vector<32x128xf32>
    %15 = arith.addf %9, %14 : vector<32x128xf32>
    %cst = arith.constant 0.000000e+00 : f32
    %16 = vector.broadcast %cst : f32 to vector<32x128xf32>
    %17 = arith.maximumf %15, %16 : vector<32x128xf32>
    %c0_5 = arith.constant 0 : index
    %c0_6 = arith.constant 0 : index
    %18 = vector.load %arg4[%c0_5, %c0_6] : memref<32x32xf32, #tpu.memory_space<vmem>>, vector<32x32xf32>
    %c0_7 = arith.constant 0 : index
    %c0_8 = arith.constant 0 : index
    %19 = vector.load %arg5[%c0_7, %c0_8] : memref<32x1xf32, #tpu.memory_space<vmem>>, vector<32x1xf32>
    %cst_9 = arith.constant dense<0.000000e+00> : vector<32x128xf32>
    %20 = tpu.matmul %18, %17, %cst_9 {dimension_numbers = #tpu.dot_dimension_numbers<[1], [0], [0], [1], [0, 0, 1, 1], [], []>, precision = #tpu.contract_precision<fp32>} : vector<32x32xf32>, vector<32x128xf32>, vector<32x128xf32> -> vector<32x128xf32>
    %21 = vector.broadcast %19 : vector<32x1xf32> to vector<32x128xf32>
    %22 = arith.addf %20, %21 : vector<32x128xf32>
    %cst_10 = arith.constant 0.000000e+00 : f32
    %23 = vector.broadcast %cst_10 : f32 to vector<32x128xf32>
    %24 = arith.maximumf %22, %23 : vector<32x128xf32>
    %c0_11 = arith.constant 0 : index
    %c0_12 = arith.constant 0 : index
    %25 = vector.load %arg6[%c0_11, %c0_12] : memref<16x32xf32, #tpu.memory_space<vmem>>, vector<16x32xf32>
    %c0_13 = arith.constant 0 : index
    %c0_14 = arith.constant 0 : index
    %26 = vector.load %arg7[%c0_13, %c0_14] : memref<16x1xf32, #tpu.memory_space<vmem>>, vector<16x1xf32>
    %cst_15 = arith.constant dense<0.000000e+00> : vector<16x128xf32>
    %27 = tpu.matmul %25, %24, %cst_15 {dimension_numbers = #tpu.dot_dimension_numbers<[1], [0], [0], [1], [0, 0, 1, 1], [], []>, precision = #tpu.contract_precision<fp32>} : vector<16x32xf32>, vector<32x128xf32>, vector<16x128xf32> -> vector<16x128xf32>
    %28 = vector.broadcast %26 : vector<16x1xf32> to vector<16x128xf32>
    %29 = arith.addf %27, %28 : vector<16x128xf32>
    %c0_16 = arith.constant 0 : index
    %c0_17 = arith.constant 0 : index
    %30 = vector.load %arg8[%c0_16, %c0_17] : memref<16x128xf32, #tpu.memory_space<vmem>>, vector<16x128xf32>
    tpu.vector_store %arg8[%c0_16, %c0_17], %29 {strides = array<i32>} : memref<16x128xf32, #tpu.memory_space<vmem>>, vector<16x128xf32>,
    return
  }
  func.func @transform_0(%arg0: i32) -> (i32, i32) {
    %c0_i32 = arith.constant 0 : i32
    %c0_i32_0 = arith.constant 0 : i32
    return %c0_i32, %arg0 : i32, i32
  }
  func.func @transform_1(%arg0: i32) -> (i32, i32) {
    %c0_i32 = arith.constant 0 : i32
    %c0_i32_0 = arith.constant 0 : i32
    %c0_i32_1 = arith.constant 0 : i32
    return %c0_i32, %c0_i32_0 : i32, i32
  }
  func.func @transform_2(%arg0: i32) -> (i32, i32) {
    %c0_i32 = arith.constant 0 : i32
    %c0_i32_0 = arith.constant 0 : i32
    %c0_i32_1 = arith.constant 0 : i32
    return %c0_i32, %c0_i32_0 : i32, i32
  }
  func.func @transform_3(%arg0: i32) -> (i32, i32) {
    %c0_i32 = arith.constant 0 : i32
    %c0_i32_0 = arith.constant 0 : i32
    %c0_i32_1 = arith.constant 0 : i32
    return %c0_i32, %c0_i32_0 : i32, i32
  }
  func.func @transform_4(%arg0: i32) -> (i32, i32) {
    %c0_i32 = arith.constant 0 : i32
    %c0_i32_0 = arith.constant 0 : i32
    %c0_i32_1 = arith.constant 0 : i32
    return %c0_i32, %c0_i32_0 : i32, i32
  }
  func.func @transform_5(%arg0: i32) -> (i32, i32) {
    %c0_i32 = arith.constant 0 : i32
    %c0_i32_0 = arith.constant 0 : i32
    %c0_i32_1 = arith.constant 0 : i32
    return %c0_i32, %c0_i32_0 : i32, i32
  }
  func.func @transform_6(%arg0: i32) -> (i32, i32) {
    %c0_i32 = arith.constant 0 : i32
    %c0_i32_0 = arith.constant 0 : i32
    %c0_i32_1 = arith.constant 0 : i32
    return %c0_i32, %c0_i32_0 : i32, i32
  }
  func.func @transform_7(%arg0: i32) -> (i32, i32) {
    %c0_i32 = arith.constant 0 : i32
    %c0_i32_0 = arith.constant 0 : i32
    return %c0_i32, %arg0 : i32, i32
  }
}

</mosaic_0001>

<llo_original>
// kernel: tpu_custom_call.1
$region0: #{tpu_custom_call.1}
  #allocation0 [shape = 'u32[]', space=smem, size = 0x4, offset = 0x4, fixed_abs, tag = 'smem constant byte address 0x4 - core index']
  #allocation1 [shape = 'u32[72,128]{1,0:T(1,128)}', space=vmem, size = 0x9000, scoped, tag = 'internal scratch']
  %s0 = inlined_call_operand.vmem [shape: f32[2,128], index: 0, kind: input, shape index: {}]
  %s1 = inlined_call_operand.vmem [shape: f32[32,2], index: 1, kind: input, shape index: {}]
  %s2 = inlined_call_operand.vmem [shape: f32[32,1], index: 2, kind: input, shape index: {}]
  %s3 = inlined_call_operand.vmem [shape: f32[32,32], index: 3, kind: input, shape index: {}]
  %s4 = inlined_call_operand.vmem [shape: f32[32,1], index: 4, kind: input, shape index: {}]
  %s5 = inlined_call_operand.vmem [shape: f32[16,32], index: 5, kind: input, shape index: {}]
  %s6 = inlined_call_operand.vmem [shape: f32[16,1], index: 6, kind: input, shape index: {}]
  %s7 = inlined_call_operand.hbm [shape: f32[16,128], index: 7, kind: output, shape index: {}]
  %s8 = sld [smem:[#allocation0]]
  $region38: #{tpu_custom_call.1} parent=0
    _
  %s10 = ssub.s32 1, %s8
  %s11 = scalar_select 0, %s10, %s8
  $region1: #{tpu_custom_call.1} parent=0
    #allocation2 [shape = 'u8[8192]{0}', space=vmem, size = 0x2000, scoped, tag = 'output window, operand 0, single buffered']
    #allocation3 [shape = 's32[1]{0}', space=sflag, size = 0x4, scoped, tag = 'scoped memory for tpu_custom_call.1']
    %12 = vsyncpa [#allocation3], 0
    // Predicated region
    $region2: #{tpu_custom_call.1} parent=1 // pred_check
      _
    $region3: #{tpu_custom_call.1} parent=1 // pred_check_branch
      %14 = sbr.rel (0) target = $region5
    $region4: #{tpu_custom_call.1} parent=1 // pred_region
      _
    $region5: #{tpu_custom_call.1} parent=1 // pred_fallthru
      _
    // Predicated region
    $region6: #{tpu_custom_call.1} parent=1 // pred_check
      _
    $region7: #{tpu_custom_call.1} parent=1 // pred_check_branch
      %16 = sbr.rel (0) target = $region9
    $region8: #{tpu_custom_call.1} parent=1 // pred_region
      _
    $region9: #{tpu_custom_call.1} parent=1 // pred_fallthru
      _
    // Predicated region
    $region10: #{tpu_custom_call.1} parent=1 // pred_check
      _
    $region11: #{tpu_custom_call.1} parent=1 // pred_check_branch
      %18 = sbr.rel (0) target = $region13
    $region12: #{tpu_custom_call.1} parent=1 // pred_region
      _
    $region13: #{tpu_custom_call.1} parent=1 // pred_fallthru
      _
    // Predicated region
    $region14: #{tpu_custom_call.1} parent=1 // pred_check
      _
    $region15: #{tpu_custom_call.1} parent=1 // pred_check_branch
      %20 = sbr.rel (0) target = $region17
    $region16: #{tpu_custom_call.1} parent=1 // pred_region
      _
    $region17: #{tpu_custom_call.1} parent=1 // pred_fallthru
      _
    // Predicated region
    $region18: #{tpu_custom_call.1} parent=1 // pred_check
      _
    $region19: #{tpu_custom_call.1} parent=1 // pred_check_branch
      %22 = sbr.rel (0) target = $region21
    $region20: #{tpu_custom_call.1} parent=1 // pred_region
      _
    $region21: #{tpu_custom_call.1} parent=1 // pred_fallthru
      _
    // Predicated region
    $region22: #{tpu_custom_call.1} parent=1 // pred_check
      _
    $region23: #{tpu_custom_call.1} parent=1 // pred_check_branch
      %24 = sbr.rel (0) target = $region25
    $region24: #{tpu_custom_call.1} parent=1 // pred_region
      _
    $region25: #{tpu_custom_call.1} parent=1 // pred_fallthru
      _
    // Predicated region
    $region26: #{tpu_custom_call.1} parent=1 // pred_check
      _
    $region27: #{tpu_custom_call.1} parent=1 // pred_check_branch
      %26 = sbr.rel (0) target = $region29
    $region28: #{tpu_custom_call.1} parent=1 // pred_region
      _
    $region29: #{tpu_custom_call.1} parent=1 // pred_fallthru
      _
    %v27 = vld [vmem:[%s0] sm:$0x3]
    %v28 = vld [vmem:[%s1] sm:$0xff]
    %v29 = vld [vmem:[%s1 + $0x8] sm:$0xff]
    %v30 = vld [vmem:[%s1 + $0x10] sm:$0xff]
    %v31 = vld [vmem:[%s1 + $0x18] sm:$0xff]
    %v32 = vld [vmem:[%s2] sm:$0xff]
    %v33 = vld [vmem:[%s2 + $0x8] sm:$0xff]
    %v34 = vld [vmem:[%s2 + $0x10] sm:$0xff]
    %v35 = vld [vmem:[%s2 + $0x18] sm:$0xff]
    %37 = vset.pattern.permute.xlu0 0
    %38 = vperm.xlu0 %37, %v28
    %v39 = vpop.permute.xlu0 %38
    %42 = vset.pattern.permute.xlu0 0
    %43 = vperm.xlu0 %42, %v29
    %v44 = vpop.permute.xlu0 %43
    %47 = vset.pattern.permute.xlu0 0
    %48 = vperm.xlu0 %47, %v30
    %v49 = vpop.permute.xlu0 %48
    %52 = vset.pattern.permute.xlu0 0
    %53 = vperm.xlu0 %52, %v31
    %v54 = vpop.permute.xlu0 %53
    %v56 = vperm.slane %v27, 0
    %v57 = vmul.f32 %v39, %v56
    %v58 = vmul.f32 %v44, %v56
    %v59 = vmul.f32 %v49, %v56
    %v60 = vmul.f32 %v54, %v56
    %62 = vset.pattern.permute.xlu0 0
    %63 = vperm.xlu0 %62, %v32
    %v64 = vpop.permute.xlu0 %63
    %67 = vset.pattern.permute.xlu0 0
    %68 = vperm.xlu0 %67, %v33
    %v69 = vpop.permute.xlu0 %68
    %72 = vset.pattern.permute.xlu0 0
    %73 = vperm.xlu0 %72, %v34
    %v74 = vpop.permute.xlu0 %73
    %77 = vset.pattern.permute.xlu0 0
    %78 = vperm.xlu0 %77, %v35
    %v79 = vpop.permute.xlu0 %78
    %v81 = vadd.f32 %v64, %v57
    %v82 = vadd.f32 %v69, %v58
    %v83 = vadd.f32 %v74, %v59
    %v84 = vadd.f32 %v79, %v60
    %85 = vset.pattern.permute.xlu0 1
    %86 = vperm.xlu0 %85, %v28
    %v87 = vpop.permute.xlu0 %86
    %89 = vset.pattern.permute.xlu0 1
    %90 = vperm.xlu0 %89, %v29
    %v91 = vpop.permute.xlu0 %90
    %93 = vset.pattern.permute.xlu0 1
    %94 = vperm.xlu0 %93, %v30
    %v95 = vpop.permute.xlu0 %94
    %97 = vset.pattern.permute.xlu0 1
    %98 = vperm.xlu0 %97, %v31
    %v99 = vpop.permute.xlu0 %98
    %v101 = vperm.slane %v27, 1
    %v102 = vmul.f32 %v87, %v101
    %v103 = vmul.f32 %v91, %v101
    %v104 = vmul.f32 %v95, %v101
    %v105 = vmul.f32 %v99, %v101
    %v106 = vadd.f32 %v81, %v102
    %v107 = vadd.f32 %v82, %v103
    %v108 = vadd.f32 %v83, %v104
    %v109 = vadd.f32 %v84, %v105
    %v110 = vmax.f32 %v106, 0.0
    %v111 = vmax.f32 %v107, 0.0
    %v112 = vmax.f32 %v108, 0.0
    %v113 = vmax.f32 %v109, 0.0
    %v114 = vld [vmem:[%s3] sm:$0xff]
    %v115 = vld [vmem:[%s3 + $0x8] sm:$0xff]
    %v116 = vld [vmem:[%s3 + $0x10] sm:$0xff]
    %v117 = vld [vmem:[%s3 + $0x18] sm:$0xff]
    %v118 = vld [vmem:[%s4] sm:$0xff]
    %v119 = vld [vmem:[%s4 + $0x8] sm:$0xff]
    %v120 = vld [vmem:[%s4 + $0x10] sm:$0xff]
    %v121 = vld [vmem:[%s4 + $0x18] sm:$0xff]
    %123 = vset.pattern.permute.xlu0 0
    %124 = vperm.xlu0 %123, %v118
    %v125 = vpop.permute.xlu0 %124
    %128 = vset.pattern.permute.xlu0 0
    %129 = vperm.xlu0 %128, %v119
    %v130 = vpop.permute.xlu0 %129
    %133 = vset.pattern.permute.xlu0 0
    %134 = vperm.xlu0 %133, %v120
    %v135 = vpop.permute.xlu0 %134
    %138 = vset.pattern.permute.xlu0 0
    %139 = vperm.xlu0 %138, %v121
    %v140 = vpop.permute.xlu0 %139
    %vm142 = vcmask 261120
    %v144 = vsel %vm142, %v114, 0
    %v147 = vsel %vm142, %v115, 0
    %v150 = vsel %vm142, %v116, 0
    %v153 = vsel %vm142, %v117, 0
    %155 = vmatpush.msra.mxu0 0.0
    %156 = vmatpush.msra.mxu0 0.0
    %157 = vmatpush.msra.mxu0 0.0
    %158 = vmatpush.msra.mxu0 0.0
    %159 = vmatpush.msra.mxu0 0.0
    %160 = vmatpush.msra.mxu0 0.0
    %161 = vmatpush.msra.mxu0 0.0
    %162 = vmatpush.msra.mxu0 0.0
    %163 = vmatpush.msra.mxu0 0.0
    %164 = vmatpush.msra.mxu0 0.0
    %165 = vmatpush.msra.mxu0 0.0
    %166 = vmatpush.msra.mxu0 0.0
    %v167 = vand.u32 %v113, 4294901760
    %168 = vmatpush.msra.mxu0 %v167
    %v169 = vand.u32 %v112, 4294901760
    %170 = vmatpush.msra.mxu0 %v169
    %v171 = vand.u32 %v111, 4294901760
    %172 = vmatpush.msra.mxu0 %v171
    %v173 = vand.u32 %v110, 4294901760
    %174 = vmatpush.msra.mxu0 %v173
    %v175 = vand.u32 %v144, 4294901760
    %v176 = vsub.f32 %v144, %v175
    %v177 = vand.u32 %v176, 4294901760
    %v178 = vsub.f32 %v176, %v177
    %v179 = vand.u32 %v178, 4294901760
    %180 = vmatmul.f32.gmra.mxu0 %v179
    %v181 = vpop.f32.mrf.mxu0
    %v182 = vadd.f32 %v125, %v181
    %v183 = vand.u32 %v147, 4294901760
    %v184 = vsub.f32 %v147, %v183
    %v185 = vand.u32 %v184, 4294901760
    %v186 = vsub.f32 %v184, %v185
    %v187 = vand.u32 %v186, 4294901760
    %188 = vmatmul.f32.gmra.mxu0 %v187
    %v189 = vpop.f32.mrf.mxu0
    %v190 = vadd.f32 %v130, %v189
    %v191 = vand.u32 %v150, 4294901760
    %v192 = vsub.f32 %v150, %v191
    %v193 = vand.u32 %v192, 4294901760
    %v194 = vsub.f32 %v192, %v193
    %v195 = vand.u32 %v194, 4294901760
    %196 = vmatmul.f32.gmra.mxu0 %v195
    %v197 = vpop.f32.mrf.mxu0
    %v198 = vadd.f32 %v135, %v197
    %v199 = vand.u32 %v153, 4294901760
    %v200 = vsub.f32 %v153, %v199
    %v201 = vand.u32 %v200, 4294901760
    %v202 = vsub.f32 %v200, %v201
    %v203 = vand.u32 %v202, 4294901760
    %204 = vmatmul.f32.gmra.mxu0 %v203
    %v205 = vpop.f32.mrf.mxu0
    %v206 = vadd.f32 %v140, %v205
    %207 = vdwg.mxu0
    %208 = vmatpush.msra.mxu0 0.0
    %209 = vmatpush.msra.mxu0 0.0
    %210 = vmatpush.msra.mxu0 0.0
    %211 = vmatpush.msra.mxu0 0.0
    %212 = vmatpush.msra.mxu0 0.0
    %213 = vmatpush.msra.mxu0 0.0
    %214 = vmatpush.msra.mxu0 0.0
    %215 = vmatpush.msra.mxu0 0.0
    %216 = vmatpush.msra.mxu0 0.0
    %217 = vmatpush.msra.mxu0 0.0
    %218 = vmatpush.msra.mxu0 0.0
    %219 = vmatpush.msra.mxu0 0.0
    %v220 = vand.u32 %v113, 4294901760
    %v221 = vsub.f32 %v113, %v220
    %v222 = vand.u32 %v221, 4294901760
    %v223 = vsub.f32 %v221, %v222
    %v224 = vand.u32 %v223, 4294901760
    %225 = vmatpush.msra.mxu0 %v224
    %v226 = vand.u32 %v112, 4294901760
    %v227 = vsub.f32 %v112, %v226
    %v228 = vand.u32 %v227, 4294901760
    %v229 = vsub.f32 %v227, %v228
    %v230 = vand.u32 %v229, 4294901760
    %231 = vmatpush.msra.mxu0 %v230
    %v232 = vand.u32 %v111, 4294901760
    %v233 = vsub.f32 %v111, %v232
    %v234 = vand.u32 %v233, 4294901760
    %v235 = vsub.f32 %v233, %v234
    %v236 = vand.u32 %v235, 4294901760
    %237 = vmatpush.msra.mxu0 %v236
    %v238 = vand.u32 %v110, 4294901760
    %v239 = vsub.f32 %v110, %v238
    %v240 = vand.u32 %v239, 4294901760
    %v241 = vsub.f32 %v239, %v240
    %v242 = vand.u32 %v241, 4294901760
    %243 = vmatpush.msra.mxu0 %v242
    %v244 = vand.u32 %v144, 4294901760
    %245 = vmatmul.f32.gmra.mxu0 %v244
    %v246 = vpop.f32.mrf.mxu0
    %v247 = vadd.f32 %v182, %v246
    %v248 = vand.u32 %v147, 4294901760
    %249 = vmatmul.f32.gmra.mxu0 %v248
    %v250 = vpop.f32.mrf.mxu0
    %v251 = vadd.f32 %v190, %v250
    %v252 = vand.u32 %v150, 4294901760
    %253 = vmatmul.f32.gmra.mxu0 %v252
    %v254 = vpop.f32.mrf.mxu0
    %v255 = vadd.f32 %v198, %v254
    %v256 = vand.u32 %v153, 4294901760
    %257 = vmatmul.f32.gmra.mxu0 %v256
    %v258 = vpop.f32.mrf.mxu0
    %v259 = vadd.f32 %v206, %v258
    %260 = vdwg.mxu0
    %261 = vmatpush.msra.mxu0 0.0
    %262 = vmatpush.msra.mxu0 0.0
    %263 = vmatpush.msra.mxu0 0.0
    %264 = vmatpush.msra.mxu0 0.0
    %265 = vmatpush.msra.mxu0 0.0
    %266 = vmatpush.msra.mxu0 0.0
    %267 = vmatpush.msra.mxu0 0.0
    %268 = vmatpush.msra.mxu0 0.0
    %269 = vmatpush.msra.mxu0 0.0
    %270 = vmatpush.msra.mxu0 0.0
    %271 = vmatpush.msra.mxu0 0.0
    %272 = vmatpush.msra.mxu0 0.0
    %v273 = vand.u32 %v113, 4294901760
    %v274 = vsub.f32 %v113, %v273
    %275 = vmatpush.msra.mxu0 %v274
    %v276 = vand.u32 %v112, 4294901760
    %v277 = vsub.f32 %v112, %v276
    %278 = vmatpush.msra.mxu0 %v277
    %v279 = vand.u32 %v111, 4294901760
    %v280 = vsub.f32 %v111, %v279
    %281 = vmatpush.msra.mxu0 %v280
    %v282 = vand.u32 %v110, 4294901760
    %v283 = vsub.f32 %v110, %v282
    %284 = vmatpush.msra.mxu0 %v283
    %v285 = vand.u32 %v144, 4294901760
    %v286 = vsub.f32 %v144, %v285
    %287 = vmatmul.f32.gmra.mxu0 %v286
    %v288 = vpop.f32.mrf.mxu0
    %v289 = vadd.f32 %v247, %v288
    %v290 = vand.u32 %v147, 4294901760
    %v291 = vsub.f32 %v147, %v290
    %292 = vmatmul.f32.gmra.mxu0 %v291
    %v293 = vpop.f32.mrf.mxu0
    %v294 = vadd.f32 %v251, %v293
    %v295 = vand.u32 %v150, 4294901760
    %v296 = vsub.f32 %v150, %v295
    %297 = vmatmul.f32.gmra.mxu0 %v296
    %v298 = vpop.f32.mrf.mxu0
    %v299 = vadd.f32 %v255, %v298
    %v300 = vand.u32 %v153, 4294901760
    %v301 = vsub.f32 %v153, %v300
    %302 = vmatmul.f32.gmra.mxu0 %v301
    %v303 = vpop.f32.mrf.mxu0
    %v304 = vadd.f32 %v259, %v303
    %305 = vdwg.mxu0
    %306 = vmatpush.msra.mxu0 0.0
    %307 = vmatpush.msra.mxu0 0.0
    %308 = vmatpush.msra.mxu0 0.0
    %309 = vmatpush.msra.mxu0 0.0
    %310 = vmatpush.msra.mxu0 0.0
    %311 = vmatpush.msra.mxu0 0.0
    %312 = vmatpush.msra.mxu0 0.0
    %313 = vmatpush.msra.mxu0 0.0
    %314 = vmatpush.msra.mxu0 0.0
    %315 = vmatpush.msra.mxu0 0.0
    %316 = vmatpush.msra.mxu0 0.0
    %317 = vmatpush.msra.mxu0 0.0
    %v318 = vand.u32 %v113, 4294901760
    %319 = vmatpush.msra.mxu0 %v318
    %v320 = vand.u32 %v112, 4294901760
    %321 = vmatpush.msra.mxu0 %v320
    %v322 = vand.u32 %v111, 4294901760
    %323 = vmatpush.msra.mxu0 %v322
    %v324 = vand.u32 %v110, 4294901760
    %325 = vmatpush.msra.mxu0 %v324
    %v326 = vand.u32 %v144, 4294901760
    %v327 = vsub.f32 %v144, %v326
    %v328 = vand.u32 %v327, 4294901760
    %329 = vmatmul.f32.gmra.mxu0 %v328
    %v330 = vpop.f32.mrf.mxu0
    %v331 = vadd.f32 %v289, %v330
    %v332 = vand.u32 %v147, 4294901760
    %v333 = vsub.f32 %v147, %v332
    %v334 = vand.u32 %v333, 4294901760
    %335 = vmatmul.f32.gmra.mxu0 %v334
    %v336 = vpop.f32.mrf.mxu0
    %v337 = vadd.f32 %v294, %v336
    %v338 = vand.u32 %v150, 4294901760
    %v339 = vsub.f32 %v150, %v338
    %v340 = vand.u32 %v339, 4294901760
    %341 = vmatmul.f32.gmra.mxu0 %v340
    %v342 = vpop.f32.mrf.mxu0
    %v343 = vadd.f32 %v299, %v342
    %v344 = vand.u32 %v153, 4294901760
    %v345 = vsub.f32 %v153, %v344
    %v346 = vand.u32 %v345, 4294901760
    %347 = vmatmul.f32.gmra.mxu0 %v346
    %v348 = vpop.f32.mrf.mxu0
    %v349 = vadd.f32 %v304, %v348
    %350 = vdwg.mxu0
    %351 = vmatpush.msra.mxu0 0.0
    %352 = vmatpush.msra.mxu0 0.0
    %353 = vmatpush.msra.mxu0 0.0
    %354 = vmatpush.msra.mxu0 0.0
    %355 = vmatpush.msra.mxu0 0.0
    %356 = vmatpush.msra.mxu0 0.0
    %357 = vmatpush.msra.mxu0 0.0
    %358 = vmatpush.msra.mxu0 0.0
    %359 = vmatpush.msra.mxu0 0.0
    %360 = vmatpush.msra.mxu0 0.0
    %361 = vmatpush.msra.mxu0 0.0
    %362 = vmatpush.msra.mxu0 0.0
    %v363 = vand.u32 %v113, 4294901760
    %v364 = vsub.f32 %v113, %v363
    %v365 = vand.u32 %v364, 4294901760
    %366 = vmatpush.msra.mxu0 %v365
    %v367 = vand.u32 %v112, 4294901760
    %v368 = vsub.f32 %v112, %v367
    %v369 = vand.u32 %v368, 4294901760
    %370 = vmatpush.msra.mxu0 %v369
    %v371 = vand.u32 %v111, 4294901760
    %v372 = vsub.f32 %v111, %v371
    %v373 = vand.u32 %v372, 4294901760
    %374 = vmatpush.msra.mxu0 %v373
    %v375 = vand.u32 %v110, 4294901760
    %v376 = vsub.f32 %v110, %v375
    %v377 = vand.u32 %v376, 4294901760
    %378 = vmatpush.msra.mxu0 %v377
    %v379 = vand.u32 %v144, 4294901760
    %380 = vmatmul.f32.gmra.mxu0 %v379
    %v381 = vpop.f32.mrf.mxu0
    %v382 = vadd.f32 %v331, %v381
    %v383 = vand.u32 %v147, 4294901760
    %384 = vmatmul.f32.gmra.mxu0 %v383
    %v385 = vpop.f32.mrf.mxu0
    %v386 = vadd.f32 %v337, %v385
    %v387 = vand.u32 %v150, 4294901760
    %388 = vmatmul.f32.gmra.mxu0 %v387
    %v389 = vpop.f32.mrf.mxu0
    %v390 = vadd.f32 %v343, %v389
    %v391 = vand.u32 %v153, 4294901760
    %392 = vmatmul.f32.gmra.mxu0 %v391
    %v393 = vpop.f32.mrf.mxu0
    %v394 = vadd.f32 %v349, %v393
    %395 = vdwg.mxu0
    %396 = vmatpush.msra.mxu0 0.0
    %397 = vmatpush.msra.mxu0 0.0
    %398 = vmatpush.msra.mxu0 0.0
    %399 = vmatpush.msra.mxu0 0.0
    %400 = vmatpush.msra.mxu0 0.0
    %401 = vmatpush.msra.mxu0 0.0
    %402 = vmatpush.msra.mxu0 0.0
    %403 = vmatpush.msra.mxu0 0.0
    %404 = vmatpush.msra.mxu0 0.0
    %405 = vmatpush.msra.mxu0 0.0
    %406 = vmatpush.msra.mxu0 0.0
    %407 = vmatpush.msra.mxu0 0.0
    %v408 = vand.u32 %v113, 4294901760
    %409 = vmatpush.msra.mxu0 %v408
    %v410 = vand.u32 %v112, 4294901760
    %411 = vmatpush.msra.mxu0 %v410
    %v412 = vand.u32 %v111, 4294901760
    %413 = vmatpush.msra.mxu0 %v412
    %v414 = vand.u32 %v110, 4294901760
    %415 = vmatpush.msra.mxu0 %v414
    %v416 = vand.u32 %v144, 4294901760
    %417 = vmatmul.f32.gmra.mxu0 %v416
    %v418 = vpop.f32.mrf.mxu0
    %v419 = vadd.f32 %v382, %v418
    %v420 = vand.u32 %v147, 4294901760
    %421 = vmatmul.f32.gmra.mxu0 %v420
    %v422 = vpop.f32.mrf.mxu0
    %v423 = vadd.f32 %v386, %v422
    %v424 = vand.u32 %v150, 4294901760
    %425 = vmatmul.f32.gmra.mxu0 %v424
    %v426 = vpop.f32.mrf.mxu0
    %v427 = vadd.f32 %v390, %v426
    %v428 = vand.u32 %v153, 4294901760
    %429 = vmatmul.f32.gmra.mxu0 %v428
    %v430 = vpop.f32.mrf.mxu0
    %v431 = vadd.f32 %v394, %v430
    %432 = vdwg.mxu0
    %v433 = vmax.f32 %v419, 0.0
    %v434 = vmax.f32 %v423, 0.0
    %v435 = vmax.f32 %v427, 0.0
    %v436 = vmax.f32 %v431, 0.0
    %v437 = vld [vmem:[%s5] sm:$0xff]
    %v438 = vld [vmem:[%s5 + $0x8] sm:$0xff]
    %v439 = vld [vmem:[%s6] sm:$0xff]
    %v440 = vld [vmem:[%s6 + $0x8] sm:$0xff]
    %442 = vset.pattern.permute.xlu0 0
    %443 = vperm.xlu0 %442, %v439
    %v444 = vpop.permute.xlu0 %443
    %447 = vset.pattern.permute.xlu0 0
    %448 = vperm.xlu0 %447, %v440
    %v449 = vpop.permute.xlu0 %448
    %v452 = vsel %vm142, %v437, 0
    %v455 = vsel %vm142, %v438, 0
    %457 = vmatpush.msra.mxu0 0.0
    %458 = vmatpush.msra.mxu0 0.0
    %459 = vmatpush.msra.mxu0 0.0
    %460 = vmatpush.msra.mxu0 0.0
    %461 = vmatpush.msra.mxu0 0.0
    %462 = vmatpush.msra.mxu0 0.0
    %463 = vmatpush.msra.mxu0 0.0
    %464 = vmatpush.msra.mxu0 0.0
    %465 = vmatpush.msra.mxu0 0.0
    %466 = vmatpush.msra.mxu0 0.0
    %467 = vmatpush.msra.mxu0 0.0
    %468 = vmatpush.msra.mxu0 0.0
    %v469 = vand.u32 %v436, 4294901760
    %470 = vmatpush.msra.mxu0 %v469
    %v471 = vand.u32 %v435, 4294901760
    %472 = vmatpush.msra.mxu0 %v471
    %v473 = vand.u32 %v434, 4294901760
    %474 = vmatpush.msra.mxu0 %v473
    %v475 = vand.u32 %v433, 4294901760
    %476 = vmatpush.msra.mxu0 %v475
    %v477 = vand.u32 %v452, 4294901760
    %v478 = vsub.f32 %v452, %v477
    %v479 = vand.u32 %v478, 4294901760
    %v480 = vsub.f32 %v478, %v479
    %v481 = vand.u32 %v480, 4294901760
    %482 = vmatmul.f32.gmra.mxu0 %v481
    %v483 = vpop.f32.mrf.mxu0
    %v484 = vadd.f32 %v444, %v483
    %v485 = vand.u32 %v455, 4294901760
    %v486 = vsub.f32 %v455, %v485
    %v487 = vand.u32 %v486, 4294901760
    %v488 = vsub.f32 %v486, %v487
    %v489 = vand.u32 %v488, 4294901760
    %490 = vmatmul.f32.gmra.mxu0 %v489
    %v491 = vpop.f32.mrf.mxu0
    %v492 = vadd.f32 %v449, %v491
    %493 = vdwg.mxu0
    %494 = vmatpush.msra.mxu0 0.0
    %495 = vmatpush.msra.mxu0 0.0
    %496 = vmatpush.msra.mxu0 0.0
    %497 = vmatpush.msra.mxu0 0.0
    %498 = vmatpush.msra.mxu0 0.0
    %499 = vmatpush.msra.mxu0 0.0
    %500 = vmatpush.msra.mxu0 0.0
    %501 = vmatpush.msra.mxu0 0.0
    %502 = vmatpush.msra.mxu0 0.0
    %503 = vmatpush.msra.mxu0 0.0
    %504 = vmatpush.msra.mxu0 0.0
    %505 = vmatpush.msra.mxu0 0.0
    %v506 = vand.u32 %v436, 4294901760
    %v507 = vsub.f32 %v436, %v506
    %v508 = vand.u32 %v507, 4294901760
    %v509 = vsub.f32 %v507, %v508
    %v510 = vand.u32 %v509, 4294901760
    %511 = vmatpush.msra.mxu0 %v510
    %v512 = vand.u32 %v435, 4294901760
    %v513 = vsub.f32 %v435, %v512
    %v514 = vand.u32 %v513, 4294901760
    %v515 = vsub.f32 %v513, %v514
    %v516 = vand.u32 %v515, 4294901760
    %517 = vmatpush.msra.mxu0 %v516
    %v518 = vand.u32 %v434, 4294901760
    %v519 = vsub.f32 %v434, %v518
    %v520 = vand.u32 %v519, 4294901760
    %v521 = vsub.f32 %v519, %v520
    %v522 = vand.u32 %v521, 4294901760
    %523 = vmatpush.msra.mxu0 %v522
    %v524 = vand.u32 %v433, 4294901760
    %v525 = vsub.f32 %v433, %v524
    %v526 = vand.u32 %v525, 4294901760
    %v527 = vsub.f32 %v525, %v526
    %v528 = vand.u32 %v527, 4294901760
    %529 = vmatpush.msra.mxu0 %v528
    %v530 = vand.u32 %v452, 4294901760
    %531 = vmatmul.f32.gmra.mxu0 %v530
    %v532 = vpop.f32.mrf.mxu0
    %v533 = vadd.f32 %v484, %v532
    %v534 = vand.u32 %v455, 4294901760
    %535 = vmatmul.f32.gmra.mxu0 %v534
    %v536 = vpop.f32.mrf.mxu0
    %v537 = vadd.f32 %v492, %v536
    %538 = vdwg.mxu0
    %539 = vmatpush.msra.mxu0 0.0
    %540 = vmatpush.msra.mxu0 0.0
    %541 = vmatpush.msra.mxu0 0.0
    %542 = vmatpush.msra.mxu0 0.0
    %543 = vmatpush.msra.mxu0 0.0
    %544 = vmatpush.msra.mxu0 0.0
    %545 = vmatpush.msra.mxu0 0.0
    %546 = vmatpush.msra.mxu0 0.0
    %547 = vmatpush.msra.mxu0 0.0
    %548 = vmatpush.msra.mxu0 0.0
    %549 = vmatpush.msra.mxu0 0.0
    %550 = vmatpush.msra.mxu0 0.0
    %v551 = vand.u32 %v436, 4294901760
    %v552 = vsub.f32 %v436, %v551
    %553 = vmatpush.msra.mxu0 %v552
    %v554 = vand.u32 %v435, 4294901760
    %v555 = vsub.f32 %v435, %v554
    %556 = vmatpush.msra.mxu0 %v555
    %v557 = vand.u32 %v434, 4294901760
    %v558 = vsub.f32 %v434, %v557
    %559 = vmatpush.msra.mxu0 %v558
    %v560 = vand.u32 %v433, 4294901760
    %v561 = vsub.f32 %v433, %v560
    %562 = vmatpush.msra.mxu0 %v561
    %v563 = vand.u32 %v452, 4294901760
    %v564 = vsub.f32 %v452, %v563
    %565 = vmatmul.f32.gmra.mxu0 %v564
    %v566 = vpop.f32.mrf.mxu0
    %v567 = vadd.f32 %v533, %v566
    %v568 = vand.u32 %v455, 4294901760
    %v569 = vsub.f32 %v455, %v568
    %570 = vmatmul.f32.gmra.mxu0 %v569
    %v571 = vpop.f32.mrf.mxu0
    %v572 = vadd.f32 %v537, %v571
    %573 = vdwg.mxu0
    %574 = vmatpush.msra.mxu0 0.0
    %575 = vmatpush.msra.mxu0 0.0
    %576 = vmatpush.msra.mxu0 0.0
    %577 = vmatpush.msra.mxu0 0.0
    %578 = vmatpush.msra.mxu0 0.0
    %579 = vmatpush.msra.mxu0 0.0
    %580 = vmatpush.msra.mxu0 0.0
    %581 = vmatpush.msra.mxu0 0.0
    %582 = vmatpush.msra.mxu0 0.0
    %583 = vmatpush.msra.mxu0 0.0
    %584 = vmatpush.msra.mxu0 0.0
    %585 = vmatpush.msra.mxu0 0.0
    %v586 = vand.u32 %v436, 4294901760
    %587 = vmatpush.msra.mxu0 %v586
    %v588 = vand.u32 %v435, 4294901760
    %589 = vmatpush.msra.mxu0 %v588
    %v590 = vand.u32 %v434, 4294901760
    %591 = vmatpush.msra.mxu0 %v590
    %v592 = vand.u32 %v433, 4294901760
    %593 = vmatpush.msra.mxu0 %v592
    %v594 = vand.u32 %v452, 4294901760
    %v595 = vsub.f32 %v452, %v594
    %v596 = vand.u32 %v595, 4294901760
    %597 = vmatmul.f32.gmra.mxu0 %v596
    %v598 = vpop.f32.mrf.mxu0
    %v599 = vadd.f32 %v567, %v598
    %v600 = vand.u32 %v455, 4294901760
    %v601 = vsub.f32 %v455, %v600
    %v602 = vand.u32 %v601, 4294901760
    %603 = vmatmul.f32.gmra.mxu0 %v602
    %v604 = vpop.f32.mrf.mxu0
    %v605 = vadd.f32 %v572, %v604
    %606 = vdwg.mxu0
    %607 = vmatpush.msra.mxu0 0.0
    %608 = vmatpush.msra.mxu0 0.0
    %609 = vmatpush.msra.mxu0 0.0
    %610 = vmatpush.msra.mxu0 0.0
    %611 = vmatpush.msra.mxu0 0.0
    %612 = vmatpush.msra.mxu0 0.0
    %613 = vmatpush.msra.mxu0 0.0
    %614 = vmatpush.msra.mxu0 0.0
    %615 = vmatpush.msra.mxu0 0.0
    %616 = vmatpush.msra.mxu0 0.0
    %617 = vmatpush.msra.mxu0 0.0
    %618 = vmatpush.msra.mxu0 0.0
    %v619 = vand.u32 %v436, 4294901760
    %v620 = vsub.f32 %v436, %v619
    %v621 = vand.u32 %v620, 4294901760
    %622 = vmatpush.msra.mxu0 %v621
    %v623 = vand.u32 %v435, 4294901760
    %v624 = vsub.f32 %v435, %v623
    %v625 = vand.u32 %v624, 4294901760
    %626 = vmatpush.msra.mxu0 %v625
    %v627 = vand.u32 %v434, 4294901760
    %v628 = vsub.f32 %v434, %v627
    %v629 = vand.u32 %v628, 4294901760
    %630 = vmatpush.msra.mxu0 %v629
    %v631 = vand.u32 %v433, 4294901760
    %v632 = vsub.f32 %v433, %v631
    %v633 = vand.u32 %v632, 4294901760
    %634 = vmatpush.msra.mxu0 %v633
    %v635 = vand.u32 %v452, 4294901760
    %636 = vmatmul.f32.gmra.mxu0 %v635
    %v637 = vpop.f32.mrf.mxu0
    %v638 = vadd.f32 %v599, %v637
    %v639 = vand.u32 %v455, 4294901760
    %640 = vmatmul.f32.gmra.mxu0 %v639
    %v641 = vpop.f32.mrf.mxu0
    %v642 = vadd.f32 %v605, %v641
    %643 = vdwg.mxu0
    %644 = vmatpush.msra.mxu0 0.0
    %645 = vmatpush.msra.mxu0 0.0
    %646 = vmatpush.msra.mxu0 0.0
    %647 = vmatpush.msra.mxu0 0.0
    %648 = vmatpush.msra.mxu0 0.0
    %649 = vmatpush.msra.mxu0 0.0
    %650 = vmatpush.msra.mxu0 0.0
    %651 = vmatpush.msra.mxu0 0.0
    %652 = vmatpush.msra.mxu0 0.0
    %653 = vmatpush.msra.mxu0 0.0
    %654 = vmatpush.msra.mxu0 0.0
    %655 = vmatpush.msra.mxu0 0.0
    %v656 = vand.u32 %v436, 4294901760
    %657 = vmatpush.msra.mxu0 %v656
    %v658 = vand.u32 %v435, 4294901760
    %659 = vmatpush.msra.mxu0 %v658
    %v660 = vand.u32 %v434, 4294901760
    %661 = vmatpush.msra.mxu0 %v660
    %v662 = vand.u32 %v433, 4294901760
    %663 = vmatpush.msra.mxu0 %v662
    %v664 = vand.u32 %v452, 4294901760
    %665 = vmatmul.f32.gmra.mxu0 %v664
    %v666 = vpop.f32.mrf.mxu0
    %v667 = vadd.f32 %v638, %v666
    %v668 = vand.u32 %v455, 4294901760
    %669 = vmatmul.f32.gmra.mxu0 %v668
    %v670 = vpop.f32.mrf.mxu0
    %v671 = vadd.f32 %v642, %v670
    %672 = vdwg.mxu0
    %673 = vst [vmem:[#allocation2] sm:$0xff] %v667
    %674 = vst [vmem:[#allocation2 + $0x8] sm:$0xff] %v671
    // Predicated region
    $region30: #{tpu_custom_call.1} parent=1 // pred_check
      _
    $region31: #{tpu_custom_call.1} parent=1 // pred_check_branch
      %676 = sbr.rel (0) target = $region33
    $region32: #{tpu_custom_call.1} parent=1 // pred_region
      %678 = vsyncadd [#allocation3], 0
      %s679 = sshll.u32 [#allocation2], 4
      %s680 = int_to_ptr.vmem [resolvable:$true] %s679
      %s681 = sshll.u32 %s7, 4
      %s682 = int_to_ptr.hbm [resolvable:$true] %s681
      %687 = dma.vmem_to_hbm [thread:$0]  %s680, 256, %s682, [#allocation3], 128, 128, 8
    $region33: #{tpu_custom_call.1} parent=1 // pred_fallthru
      _
    // Predicated region
    $region34: #{tpu_custom_call.1} parent=1 // pred_check
      _
    $region35: #{tpu_custom_call.1} parent=1 // pred_check_branch
      %689 = sbr.rel (0) target = $region37
    $region36: #{tpu_custom_call.1} parent=1 // pred_region
      %691 = dma.done [#allocation3], 256
    $region37: #{tpu_custom_call.1} parent=1 // pred_fallthru
      _
    %692 = vsyncpa [#allocation3], 1

</llo_original>
